<compile_context>
chip_gen: v6e
topology: v6e:2x2x1
jax: 0.10.0
libtpu: 0.0.40
codegen_flags: <defaults>
</compile_context>

<pallas_src>
import math
import functools

import jax
import jax.numpy as jnp
from jax import lax
from jax.experimental import pallas as pl
from jax.experimental.pallas import tpu as pltpu


# ---------------------------------------------------------------------------
# Tile helpers
# ---------------------------------------------------------------------------
def _sublane_mult(dtype):
    itemsize = jnp.dtype(dtype).itemsize
    return {4: 8, 2: 16, 1: 32}.get(itemsize, 8)


def _pick_tile(dim, cap, mult):
    """Largest divisor of `dim` that is <= cap and a multiple of `mult`;
    falls back to the full dim (always a legal TPU block extent)."""
    cap = min(cap, dim)
    for t in range(cap, 0, -1):
        if dim % t == 0 and t % mult == 0:
            return t
    return dim


# ---------------------------------------------------------------------------
# Tiled linear: y = x @ w.T  with PyTorch Linear weight layout w: (out, in).
# ---------------------------------------------------------------------------
def _matmul_kernel(x_ref, w_ref, o_ref, acc_ref):
    @pl.when(pl.program_id(2) == 0)
    def _():
        acc_ref[...] = jnp.zeros_like(acc_ref)

    # x: (tm, tk), w: (tn, tk) -> contract on the shared K axis (no transpose copy).
    acc_ref[...] += lax.dot_general(
        x_ref[...], w_ref[...],
        dimension_numbers=(((1,), (1,)), ((), ())),
        preferred_element_type=jnp.float32,
    )

    @pl.when(pl.program_id(2) == pl.num_programs(2) - 1)
    def _():
        o_ref[...] = acc_ref[...].astype(o_ref.dtype)


def linear(x, w, *, out_dtype=None, tm_cap=512, tn_cap=512, tk_cap=512):
    """y[M, N] = x[M, K] @ w[N, K].T  (PyTorch nn.Linear weight layout)."""
    M, K = x.shape
    N, K2 = w.shape
    assert K == K2, (x.shape, w.shape)
    out_dtype = out_dtype or x.dtype

    tm = _pick_tile(M, tm_cap, _sublane_mult(x.dtype))   # sublane dim of x/out blocks
    tn = _pick_tile(N, tn_cap, 128)                      # lane dim of the out block
    tk = _pick_tile(K, tk_cap, 128)                      # lane dim of x/w blocks
    grid = (M // tm, N // tn, K // tk)

    return pl.pallas_call(
        _matmul_kernel,
        out_shape=jax.ShapeDtypeStruct((M, N), out_dtype),
        grid=grid,
        in_specs=[
            pl.BlockSpec((tm, tk), lambda i, j, k: (i, k)),
            pl.BlockSpec((tn, tk), lambda i, j, k: (j, k)),
        ],
        out_specs=pl.BlockSpec((tm, tn), lambda i, j, k: (i, j)),
        scratch_shapes=[pltpu.VMEM((tm, tn), jnp.float32)],
        compiler_params=pltpu.CompilerParams(
            dimension_semantics=("parallel", "parallel", "arbitrary"),
        ),
    )(x, w)


# ---------------------------------------------------------------------------
# Flash-style attention, heads on the grid.
#   q: (B, num_heads, S, D)    k/v: (B, num_kv_heads, S, D)
#   grid = (B, num_heads, q_tiles, kv_tiles); GQA head picked in the index_map.
#   Softmax scale is already folded into the q projection weights.
# ---------------------------------------------------------------------------
def _flash_attn_kernel(q_ref, k_ref, v_ref, o_ref, m_sc, l_sc, acc_sc):
    ki = pl.program_id(3)
    nk = pl.num_programs(3)

    @pl.when(ki == 0)
    def _():
        m_sc[...] = jnp.full_like(m_sc, -1e30)
        l_sc[...] = jnp.zeros_like(l_sc)
        acc_sc[...] = jnp.zeros_like(acc_sc)

    q = q_ref[...]                                   # (tq, D), native (bf16) dtype
    k = k_ref[...]                                   # (tk, D)
    v = v_ref[...]                                   # (tk, D)

    # scores = q @ k.T expressed as a contraction (no materialized transpose)
    s = lax.dot_general(
        q, k,
        dimension_numbers=(((1,), (1,)), ((), ())),
        preferred_element_type=jnp.float32,
    )                                                # (tq, tk) f32

    m_prev = m_sc[...]                               # (tq, 1)
    m_new = jnp.maximum(m_prev, jnp.max(s, axis=-1, keepdims=True))
    alpha = jnp.exp(m_prev - m_new)                  # (tq, 1)
    p = jnp.exp(s - m_new)                           # (tq, tk) f32

    l_sc[...] = alpha * l_sc[...] + jnp.sum(p, axis=-1, keepdims=True)
    acc_sc[...] = alpha * acc_sc[...] + lax.dot_general(
        p.astype(v.dtype), v,
        dimension_numbers=(((1,), (0,)), ((), ())),
        preferred_element_type=jnp.float32,
    )
    m_sc[...] = m_new

    @pl.when(ki == nk - 1)
    def _():
        inv_l = pl.reciprocal(l_sc[...], approx=True)        # EUP, frees VALU
        o_ref[...] = (acc_sc[...] * inv_l).astype(o_ref.dtype)


def attention(q, k, v, *, num_heads, num_kv_heads, tq_cap=256, tk_cap=512):
    """q: (B, num_heads, S, D), k/v: (B, num_kv_heads, S, D) -> (B, num_heads, S, D)."""
    B, nh, S, D = q.shape
    assert nh == num_heads
    groups = num_heads // num_kv_heads

    tq = _pick_tile(S, tq_cap, _sublane_mult(q.dtype))
    tk = _pick_tile(S, tk_cap, 128)           # lane dim of the (tq, tk) score tile
    grid = (B, num_heads, S // tq, S // tk)

    # TODO(synk): for head_dim=64 on v6e/v7x, block 2 query heads per grid step to
    # fill the 256-wide MXU; single-head blocks are correct for all head_dims.
    return pl.pallas_call(
        _flash_attn_kernel,
        out_shape=jax.ShapeDtypeStruct((B, num_heads, S, D), q.dtype),
        grid=grid,
        in_specs=[
            pl.BlockSpec((None, None, tq, D), lambda b, h, qi, ki: (b, h, qi, 0)),
            pl.BlockSpec((None, None, tk, D),
                         lambda b, h, qi, ki: (b, h // groups, ki, 0)),
            pl.BlockSpec((None, None, tk, D),
                         lambda b, h, qi, ki: (b, h // groups, ki, 0)),
        ],
        out_specs=pl.BlockSpec((None, None, tq, D), lambda b, h, qi, ki: (b, h, qi, 0)),
        scratch_shapes=[
            pltpu.VMEM((tq, 1), jnp.float32),   # running max
            pltpu.VMEM((tq, 1), jnp.float32),   # running sum
            pltpu.VMEM((tq, D), jnp.float32),   # output accumulator
        ],
        compiler_params=pltpu.CompilerParams(
            dimension_semantics=("parallel", "parallel", "parallel", "arbitrary"),
        ),
    )(q, k, v)


# ---------------------------------------------------------------------------
# One-time parameter preparation (done at "init", not per forward call):
#   * softmax scale folded into q_proj weights
#   * q/k/v projection weights concatenated into one fused QKV weight
#   * weights cast to the bf16 compute dtype
# ---------------------------------------------------------------------------
def prepare_params(params, *, num_heads, compute_dtype=jnp.bfloat16):
    hidden = params["q_proj"].shape[0]
    head_dim = hidden // num_heads
    scale = 1.0 / math.sqrt(head_dim)                 # flash_attn default softmax scale
    w_qkv = jnp.concatenate(
        [params["q_proj"] * scale, params["k_proj"], params["v_proj"]], axis=0
    ).astype(compute_dtype)                            # (H + 2*kv_dim, H)
    w_o = params["o_proj"].astype(compute_dtype)       # (H, H)
    return {"w_qkv": w_qkv, "w_o": w_o}


# ---------------------------------------------------------------------------
# VAttention forward (glue in plain JAX, hot paths in Pallas)
# ---------------------------------------------------------------------------
def vattention_forward(hidden_states, prepared, *, num_heads, num_kv_heads):
    B, S, H = hidden_states.shape
    D = H // num_heads
    kv_dim = num_kv_heads * D
    out_dtype = hidden_states.dtype
    compute_dtype = prepared["w_qkv"].dtype

    x2 = hidden_states.reshape(B * S, H).astype(compute_dtype)

    # Fused QKV projection: one bf16 matmul reads the activations once.
    qkv = linear(x2, prepared["w_qkv"]).reshape(B, S, H + 2 * kv_dim)

    # Head-major layout for per-head (lane-dense, D-wide) attention blocks.
    q = qkv[:, :, :H].reshape(B, S, num_heads, D).transpose(0, 2, 1, 3)
    k = qkv[:, :, H:H + kv_dim].reshape(B, S, num_kv_heads, D).transpose(0, 2, 1, 3)
    v = qkv[:, :, H + kv_dim:].reshape(B, S, num_kv_heads, D).transpose(0, 2, 1, 3)

    o = attention(q, k, v, num_heads=num_heads, num_kv_heads=num_kv_heads)
    o = o.transpose(0, 2, 1, 3).reshape(B * S, H)      # back to (b, s, h*d)

    out = linear(o, prepared["w_o"], out_dtype=out_dtype)
    return out.reshape(B, S, H)


# ---------------------------------------------------------------------------
# Pure-JAX reference (matches the PyTorch module semantics) for verification
# ---------------------------------------------------------------------------
def reference_forward(hidden_states, params, *, num_heads, num_kv_heads):
    B, S, H = hidden_states.shape
    D = H // num_heads
    G = num_heads // num_kv_heads
    x = hidden_states.reshape(B * S, H)
    q = (x @ params["q_proj"].T).reshape(B, S, num_heads, D)
    k = (x @ params["k_proj"].T).reshape(B, S, num_kv_heads, D)
    v = (x @ params["v_proj"].T).reshape(B, S, num_kv_heads, D)
    k = jnp.repeat(k, G, axis=2)
    v = jnp.repeat(v, G, axis=2)
    s = jnp.einsum("bqhd,bkhd->bhqk", q, k) * (1.0 / math.sqrt(D))
    p = jax.nn.softmax(s, axis=-1)
    o = jnp.einsum("bhqk,bkhd->bqhd", p, v).reshape(B * S, H)
    return (o @ params["o_proj"].T).reshape(B, S, H)


# ---------------------------------------------------------------------------
# Deterministic parameter init (synthetic; matches nn.Linear weight shapes)
# ---------------------------------------------------------------------------
def init_params(key, hidden_size, num_heads, num_kv_heads):
    head_dim = hidden_size // num_heads
    kv_dim = num_kv_heads * head_dim
    k1, k2, k3, k4 = jax.random.split(key, 4)
    bound = 1.0 / math.sqrt(hidden_size)
    return {
        "q_proj": jax.random.uniform(k1, (hidden_size, hidden_size), jnp.float32, -bound, bound),
        "k_proj": jax.random.uniform(k2, (kv_dim, hidden_size), jnp.float32, -bound, bound),
        "v_proj": jax.random.uniform(k3, (kv_dim, hidden_size), jnp.float32, -bound, bound),
        "o_proj": jax.random.uniform(k4, (hidden_size, hidden_size), jnp.float32, -bound, bound),
    }


if __name__ == "__main__":
    # Small config consistent with the module: hidden=32, heads=4, kv_heads=2 -> head_dim=8
    batch, seq, hidden = 2, 8, 32
    num_heads, num_kv_heads = 4, 2

    key = jax.random.PRNGKey(0)
    pkey, xkey = jax.random.split(key)
    params = init_params(pkey, hidden, num_heads, num_kv_heads)
    hidden_states = jax.random.normal(xkey, (batch, seq, hidden), jnp.float32)

    prepared = prepare_params(params, num_heads=num_heads)   # once, at "init"

    out = vattention_forward(
        hidden_states, prepared, num_heads=num_heads, num_kv_heads=num_kv_heads
    )
    out = jax.block_until_ready(out)
    assert out.shape == (batch, seq, hidden), out.shape
    assert jnp.all(jnp.isfinite(out))

    ref = jax.block_until_ready(
        reference_forward(hidden_states, params,
                          num_heads=num_heads, num_kv_heads=num_kv_heads)
    )
    # bf16 compute path vs f32 reference.
    max_err = float(jnp.max(jnp.abs(out - ref)))
    assert jnp.allclose(out, ref, rtol=3e-2, atol=3e-2), max_err

    print("KERNEL_OK")
</pallas_src>

<mosaic_0001>
module attributes {stable_mosaic.version = 11 : i64} {
  func.func @_matmul_kernel(%arg0: i32, %arg1: i32, %arg2: i32, %arg3: memref<16x32xbf16, #tpu.memory_space<vmem>>, %arg4: memref<64x32xbf16, #tpu.memory_space<vmem>>, %arg5: memref<16x64xbf16, #tpu.memory_space<vmem>>, %arg6: memref<16x64xf32, #tpu.memory_space<vmem>>) attributes {dimension_semantics = [#tpu.dimension_semantics<parallel>, #tpu.dimension_semantics<parallel>, #tpu.dimension_semantics<arbitrary>], iteration_bounds = array<i64: 1, 1, 1>, scalar_prefetch = 0 : i64, scratch_operands = 1 : i64, tpu.core_type = #tpu.core_type<tc>, window_params = [{transform_indices = @transform_0, window_bounds = array<i64: 16, 32>}, {transform_indices = @transform_1, window_bounds = array<i64: 64, 32>}, {transform_indices = @transform_2, window_bounds = array<i64: 16, 64>}]} {
    %c0_i32 = arith.constant 0 : i32
    %0 = arith.cmpi eq, %arg2, %c0_i32 : i32
    %1 = arith.extui %0 : i1 to i32
    %c0_i32_0 = arith.constant 0 : i32
    %2 = arith.cmpi ne, %1, %c0_i32_0 : i32
    scf.if %2 {
      %cst_10 = arith.constant 0.000000e+00 : f32
      %12 = vector.broadcast %cst_10 : f32 to vector<16x64xf32>
      %c0_11 = arith.constant 0 : index
      %c0_12 = arith.constant 0 : index
      %13 = vector.load %arg6[%c0_11, %c0_12] : memref<16x64xf32, #tpu.memory_space<vmem>>, vector<16x64xf32>
      tpu.vector_store %arg6[%c0_11, %c0_12], %12 {strides = array<i32>} : memref<16x64xf32, #tpu.memory_space<vmem>>, vector<16x64xf32>,
    } else {
    }
    %c0 = arith.constant 0 : index
    %c0_1 = arith.constant 0 : index
    %3 = vector.load %arg6[%c0, %c0_1] : memref<16x64xf32, #tpu.memory_space<vmem>>, vector<16x64xf32>
    %c0_2 = arith.constant 0 : index
    %c0_3 = arith.constant 0 : index
    %4 = vector.load %arg3[%c0_2, %c0_3] : memref<16x32xbf16, #tpu.memory_space<vmem>>, vector<16x32xbf16>
    %c0_4 = arith.constant 0 : index
    %c0_5 = arith.constant 0 : index
    %5 = vector.load %arg4[%c0_4, %c0_5] : memref<64x32xbf16, #tpu.memory_space<vmem>>, vector<64x32xbf16>
    %cst = arith.constant dense<0.000000e+00> : vector<16x64xf32>
    %6 = tpu.matmul %4, %5, %cst {dimension_numbers = #tpu.dot_dimension_numbers<[1], [1], [0], [0], [0, 0, 1, 0], [], []>} : vector<16x32xbf16>, vector<64x32xbf16>, vector<16x64xf32> -> vector<16x64xf32>
    %7 = arith.addf %3, %6 : vector<16x64xf32>
    %c0_6 = arith.constant 0 : index
    %c0_7 = arith.constant 0 : index
    %8 = vector.load %arg6[%c0_6, %c0_7] : memref<16x64xf32, #tpu.memory_space<vmem>>, vector<16x64xf32>
    tpu.vector_store %arg6[%c0_6, %c0_7], %7 {strides = array<i32>} : memref<16x64xf32, #tpu.memory_space<vmem>>, vector<16x64xf32>,
    %c0_i32_8 = arith.constant 0 : i32
    %9 = arith.cmpi eq, %arg2, %c0_i32_8 : i32
    %10 = arith.extui %9 : i1 to i32
    %c0_i32_9 = arith.constant 0 : i32
    %11 = arith.cmpi ne, %10, %c0_i32_9 : i32
    scf.if %11 {
      %c0_10 = arith.constant 0 : index
      %c0_11 = arith.constant 0 : index
      %12 = vector.load %arg6[%c0_10, %c0_11] : memref<16x64xf32, #tpu.memory_space<vmem>>, vector<16x64xf32>
      %13 = arith.truncf %12 : vector<16x64xf32> to vector<16x64xbf16>
      %c0_12 = arith.constant 0 : index
      %c0_13 = arith.constant 0 : index
      %14 = vector.load %arg5[%c0_12, %c0_13] : memref<16x64xbf16, #tpu.memory_space<vmem>>, vector<16x64xbf16>
      tpu.vector_store %arg5[%c0_12, %c0_13], %13 {strides = array<i32>} : memref<16x64xbf16, #tpu.memory_space<vmem>>, vector<16x64xbf16>,
    } else {
    }
    return
  }
  func.func @transform_0(%arg0: i32, %arg1: i32, %arg2: i32) -> (i32, i32) {
    %c0_i32 = arith.constant 0 : i32
    return %arg0, %arg2 : i32, i32
  }
  func.func @transform_1(%arg0: i32, %arg1: i32, %arg2: i32) -> (i32, i32) {
    %c0_i32 = arith.constant 0 : i32
    return %arg1, %arg2 : i32, i32
  }
  func.func @transform_2(%arg0: i32, %arg1: i32, %arg2: i32) -> (i32, i32) {
    %c0_i32 = arith.constant 0 : i32
    return %arg0, %arg1 : i32, i32
  }
}

</mosaic_0001>

<llo_original>
// kernel: tpu_custom_call.1
$region0: #{tpu_custom_call.1}
  #allocation0 [shape = 'u32[]', space=smem, size = 0x4, offset = 0x4, fixed_abs, tag = 'smem constant byte address 0x4 - core index']
  #allocation1 [shape = 'u32[144,128]{1,0:T(1,128)}', space=vmem, size = 0x12000, scoped, tag = 'internal scratch']
  #allocation2 [shape = 'f32[16,64]{1,0:T(8,128)}', space=vmem, size = 0x2000, scoped, tag = 'scratch operand']
  %s0 = inlined_call_operand.vmem [shape: bf16[16,32], index: 0, kind: input, shape index: {}]
  %s1 = inlined_call_operand.vmem [shape: bf16[64,32], index: 1, kind: input, shape index: {}]
  %s2 = inlined_call_operand.hbm [shape: bf16[16,64], index: 2, kind: output, shape index: {}]
  %s3 = sld [smem:[#allocation0]]
  $region26: #{tpu_custom_call.1} parent=0
    _
  %s5 = ssub.s32 1, %s3
  %s6 = scalar_select 0, %s5, %s3
  $region1: #{tpu_custom_call.1} parent=0
    #allocation3 [shape = 'u8[4096]{0}', space=vmem, size = 0x1000, scoped, tag = 'output window, operand 0, single buffered']
    #allocation4 [shape = 's32[1]{0}', space=sflag, size = 0x4, scoped, tag = 'scoped memory for tpu_custom_call.1']
    %7 = vsyncpa [#allocation4], 0
    // Predicated region
    $region2: #{tpu_custom_call.1} parent=1 // pred_check
      _
    $region3: #{tpu_custom_call.1} parent=1 // pred_check_branch
      %9 = sbr.rel (0) target = $region5
    $region4: #{tpu_custom_call.1} parent=1 // pred_region
      _
    $region5: #{tpu_custom_call.1} parent=1 // pred_fallthru
      _
    // Predicated region
    $region6: #{tpu_custom_call.1} parent=1 // pred_check
      _
    $region7: #{tpu_custom_call.1} parent=1 // pred_check_branch
      %11 = sbr.rel (0) target = $region9
    $region8: #{tpu_custom_call.1} parent=1 // pred_region
      _
    $region9: #{tpu_custom_call.1} parent=1 // pred_fallthru
      _
    %p13 = scmp.eq.s32.totalorder 0, 0
    // Predicated region
    $region10: #{tpu_custom_call.1} parent=1 // pred_check
      %p14 = pneg %p13
    $region11: #{tpu_custom_call.1} parent=1 // pred_check_branch
      %16 = sbr.rel (%p14) target = $region13
    $region12: #{tpu_custom_call.1} parent=1 // pred_region
      %vm17 = vcmask 523264
      %18 = vst.msk [vmem:[#allocation2] sm:$0xff] %vm17, 0.0
      %19 = vst.msk [vmem:[#allocation2 + $0x8] sm:$0xff] %vm17, 0.0
    $region13: #{tpu_custom_call.1} parent=1 // pred_fallthru
      _
    %v20 = vld [vmem:[#allocation2] sm:$0xff]
    %v21 = vld [vmem:[#allocation2 + $0x8] sm:$0xff]
    %v22 = vld [vmem:[%s0] sm:$0xf]
    %v23 = vld [vmem:[%s0 + $0x4] sm:$0xf]
    %v24 = vld [vmem:[%s1] sm:$0xf]
    %v25 = vld [vmem:[%s1 + $0x4] sm:$0xf]
    %v26 = vld [vmem:[%s1 + $0x8] sm:$0xf]
    %v27 = vld [vmem:[%s1 + $0xc] sm:$0xf]
    %v28 = vld [vmem:[%s1 + $0x10] sm:$0xf]
    %v29 = vld [vmem:[%s1 + $0x14] sm:$0xf]
    %v30 = vld [vmem:[%s1 + $0x18] sm:$0xf]
    %v31 = vld [vmem:[%s1 + $0x1c] sm:$0xf]
    %v34 = vunpack.c.l.b16 %v22
    %v35 = vunpack.c.l.b16 %v23
    %v36 = vpack.c.b16 %v35, %v34
    %v45 = vunpack.c.l.b16 %v24
    %v46 = vunpack.c.l.b16 %v25
    %v47 = vunpack.c.l.b16 %v26
    %v48 = vunpack.c.l.b16 %v27
    %v49 = vunpack.c.l.b16 %v28
    %v50 = vunpack.c.l.b16 %v29
    %v51 = vunpack.c.l.b16 %v30
    %v52 = vunpack.c.l.b16 %v31
    %v53 = vpack.c.b16 %v46, %v45
    %v54 = vpack.c.b16 %v48, %v47
    %v55 = vpack.c.b16 %v50, %v49
    %v56 = vpack.c.b16 %v52, %v51
    %vm57 = vcmask 261120
    %v59 = vsel %vm57, %v36, 0
    %v62 = vsel %vm57, %v53, 0
    %v65 = vsel %vm57, %v54, 0
    %v68 = vsel %vm57, %v55, 0
    %v71 = vsel %vm57, %v56, 0
    %73 = vmatprep.subr.bf16.mxu0 0
    %74 = vmatpush1.bf16.xpose.msra.mxu0 0
    %75 = vmatprep.subr.bf16.mxu0 0
    %76 = vmatpush1.bf16.xpose.msra.mxu0 0
    %77 = vmatprep.subr.bf16.mxu0 0
    %78 = vmatpush1.bf16.xpose.msra.mxu0 0
    %79 = vmatprep.subr.bf16.mxu0 0
    %80 = vmatpush1.bf16.xpose.msra.mxu0 0
    %81 = vmatprep.subr.bf16.mxu0 0
    %82 = vmatpush1.bf16.xpose.msra.mxu0 %v71
    %83 = vmatprep.subr.bf16.mxu0 0
    %84 = vmatpush1.bf16.xpose.msra.mxu0 %v68
    %85 = vmatprep.subr.bf16.mxu0 0
    %86 = vmatpush1.bf16.xpose.msra.mxu0 %v65
    %87 = vmatprep.subr.bf16.mxu0 0
    %88 = vmatpush1.bf16.xpose.msra.mxu0 %v62
    %89 = vmatprep.subr.bf16.mxu0 0
    %90 = vmatpush2.bf16.xpose.msra.mxu0 0
    %91 = vmatprep.subr.bf16.mxu0 0
    %92 = vmatpush2.bf16.xpose.msra.mxu0 0
    %93 = vmatprep.subr.bf16.mxu0 0
    %94 = vmatpush2.bf16.xpose.msra.mxu0 0
    %95 = vmatprep.subr.bf16.mxu0 0
    %96 = vmatpush2.bf16.xpose.msra.mxu0 0
    %97 = vmatprep.subr.bf16.mxu0 0
    %98 = vmatpush2.bf16.xpose.msra.mxu0 0
    %99 = vmatprep.subr.bf16.mxu0 0
    %100 = vmatpush2.bf16.xpose.msra.mxu0 0
    %101 = vmatprep.subr.bf16.mxu0 0
    %102 = vmatpush2.bf16.xpose.msra.mxu0 0
    %103 = vmatprep.subr.bf16.mxu0 0
    %104 = vmatpush2.bf16.xpose.msra.mxu0 0
    %105 = vmatprep.mubr.bf16.mxu0 0
    %106 = vmatmul.mubr.bf16.gmra.mxu0 %v59
    %v107 = vpop.f32.mrf.mxu0
    %v108 = vadd.f32 0.0, %v107
    %v109 = vpop.f32.mrf.mxu0
    %v110 = vpop.f32.mrf.mxu0
    %v111 = vadd.f32 0.0, %v110
    %v112 = vpop.f32.mrf.mxu0
    %113 = vdwg.mxu0
    %v114 = vadd.f32 %v20, %v108
    %v115 = vadd.f32 %v21, %v111
    %vm116 = vcmask 523264
    %117 = vst.msk [vmem:[#allocation2] sm:$0xff] %vm116, %v114
    %118 = vst.msk [vmem:[#allocation2 + $0x8] sm:$0xff] %vm116, %v115
    // Predicated region
    $region14: #{tpu_custom_call.1} parent=1 // pred_check
      %p119 = pneg %p13
    $region15: #{tpu_custom_call.1} parent=1 // pred_check_branch
      %121 = sbr.rel (%p119) target = $region17
    $region16: #{tpu_custom_call.1} parent=1 // pred_region
      %v122 = vld [vmem:[#allocation2] sm:$0xff]
      %v123 = vld [vmem:[#allocation2 + $0x8] sm:$0xff]
      %v124 = vpack.c.bf16 %v123, %v122
      %v126 = vunpack.c.l.b16 %v124
      %v127 = vunpack.c.h.b16 %v124
      %v128 = vpack.c.b16 %v126, %v126
      %v129 = vpack.c.b16 %v127, %v127
      %vm132 = vcmask 519168
      %133 = vst.msk [vmem:[#allocation3] sm:$0xf] %vm132, %v128
      %134 = vst.msk [vmem:[#allocation3 + $0x4] sm:$0xf] %vm132, %v129
    $region17: #{tpu_custom_call.1} parent=1 // pred_fallthru
      _
    // Predicated region
    $region18: #{tpu_custom_call.1} parent=1 // pred_check
      _
    $region19: #{tpu_custom_call.1} parent=1 // pred_check_branch
      %136 = sbr.rel (0) target = $region21
    $region20: #{tpu_custom_call.1} parent=1 // pred_region
      %s138 = ssub.s32 128, 128
      %139 = vsyncadd [#allocation4], %s138
      %s140 = sshll.u32 [#allocation3], 4
      %s141 = int_to_ptr.vmem [resolvable:$true] %s140
      %146 = dma.vmem_to_hbm [thread:$0]  %s141, 128, %s2, [#allocation4], 64, 64, 4
    $region21: #{tpu_custom_call.1} parent=1 // pred_fallthru
      _
    // Predicated region
    $region22: #{tpu_custom_call.1} parent=1 // pred_check
      _
    $region23: #{tpu_custom_call.1} parent=1 // pred_check_branch
      %148 = sbr.rel (0) target = $region25
    $region24: #{tpu_custom_call.1} parent=1 // pred_region
      %149 = dma.done [#allocation4], 128
    $region25: #{tpu_custom_call.1} parent=1 // pred_fallthru
      _
    %150 = vsyncpa [#allocation4], 1

</llo_original>
